<compile_context>
chip_gen: v7x
topology: tpu7x:2x2x1
jax: 0.10.0
libtpu: 0.0.40
codegen_flags: <defaults>
</compile_context>

<pallas_src>
import functools

import jax
import jax.numpy as jnp
from jax.experimental import pallas as pl
from jax.experimental.pallas import tpu as pltpu

NEG_SLOPE = 0.01   # nn.LeakyReLU default negative_slope (get_activation_fn)
LANE = 128         # lane width; lane tiles are multiples of this on all gens


def _round_up(n, m):
    return ((n + m - 1) // m) * m


def _leaky_relu(h):
    # max(h, 0.01*h) == leaky_relu(h) for slope in (0,1); no compare+select.
    return jnp.maximum(h, NEG_SLOPE * h)


def _mlp_kernel(*refs, num_layers, has_mask, compute_dtype):
    """Fused N-layer MLP on a transposed lane tile.

    x_ref:  (c_in, rt)        activations, features on sublanes, rows on lanes
    w_ref:  (c_out_l, c_in_l) nn.Linear-layout weight (whole-array resident)
    b_ref:  (c_out_l, 1)      bias (f32)
    o_ref:  (c_out, rt)       lane-dense output tile
    """
    x_ref = refs[0]
    idx = 1
    m_ref = None
    if has_mask:
        m_ref = refs[idx]
        idx += 1
    wb_refs = refs[idx:idx + 2 * num_layers]
    o_ref = refs[idx + 2 * num_layers]

    h = x_ref[...]  # (c_in, rt)
    for layer in range(num_layers):
        w = wb_refs[2 * layer][...]        # (c_out_l, c_in_l), compute_dtype
        b = wb_refs[2 * layer + 1][...]    # (c_out_l, 1), f32
        # M (rows) rides the MXU lane/N axis; f32 accumulation.
        h = jnp.dot(w, h.astype(compute_dtype),
                    preferred_element_type=jnp.float32)
        h = _leaky_relu(h + b)             # f32 elementwise (v5e-safe)

    if has_mask:
        # m_ref is (1, rt) or (c_out, rt); broadcast over the feature axis.
        h = jnp.where(m_ref[...] != 0.0, h, 0.0)

    o_ref[...] = h.astype(o_ref.dtype)


def basic_mlp_forward(x, params, mask=None, *, lane_tile=2048, use_bf16=True):
    """BasicMLP.forward.

    x:      (..., C_in) float32 -- operates only on the last axis.
    params: list of (W, b) with W in nn.Linear layout (out, in), b as (out, 1).
    mask:   optional, broadcastable to x.shape[:-1] + (1,) or (..., C_out);
            implements torch.where(mask, out, 0).
    """
    num_layers = len(params)
    c_in = params[0][0].shape[1]
    c_out = params[-1][0].shape[0]
    assert x.shape[-1] == c_in

    lead_shape = x.shape[:-1]
    M = 1
    for d in lead_shape:
        M *= int(d)

    compute_dtype = jnp.bfloat16 if use_bf16 else jnp.float32
    out_dtype = x.dtype

    # Lane tile: large enough to fill the MXU N axis and amortize per-step
    # overhead, but clamped so the grid keeps >= ~8 steps (v7x has 2 TCs).
    rt = max(LANE, _round_up(int(lane_tile), LANE))
    rt = min(rt, _round_up(max(M // 8, LANE), LANE))   # keep grid occupancy
    rt = min(rt, _round_up(M, LANE))                   # don't exceed padded M
    M_pad = _round_up(M, rt)

    # Transposed layout: features on sublanes, rows on lanes.
    x2t = x.reshape(M, c_in).T.astype(compute_dtype)   # (c_in, M)
    if M_pad != M:
        x2t = jnp.pad(x2t, ((0, 0), (0, M_pad - M)))

    inputs = [x2t]
    in_specs = [pl.BlockSpec((c_in, rt), lambda i: (0, i))]

    has_mask = mask is not None
    if has_mask:
        m = jnp.asarray(mask)
        if m.ndim < x.ndim:  # e.g. (B, S) -> (B, S, 1)
            m = m.reshape(m.shape + (1,) * (x.ndim - m.ndim))
        assert m.shape[-1] in (1, c_out), (
            f"mask trailing dim must be 1 or {c_out}, got {m.shape[-1]}")
        m_rows = m.shape[-1]
        m2 = jnp.broadcast_to(m, lead_shape + (m_rows,)).reshape(M, m_rows)
        m2 = m2.T.astype(jnp.float32)                  # (m_rows, M), no c_out bcast
        if M_pad != M:
            m2 = jnp.pad(m2, ((0, 0), (0, M_pad - M)))
        inputs.append(m2)
        in_specs.append(pl.BlockSpec((m_rows, rt), lambda i: (0, i)))

    for w, b in params:
        inputs.append(w.astype(compute_dtype))         # (out, in)
        inputs.append(b.astype(jnp.float32))           # (out, 1)
        # Whole weight / bias resident every grid step (constant block index).
        in_specs.append(pl.BlockSpec(w.shape, lambda i: (0, 0)))
        in_specs.append(pl.BlockSpec(b.shape, lambda i: (0, 0)))

    kernel = functools.partial(
        _mlp_kernel, num_layers=num_layers, has_mask=has_mask,
        compute_dtype=compute_dtype)

    out2t = pl.pallas_call(
        kernel,
        out_shape=jax.ShapeDtypeStruct((c_out, M_pad), out_dtype),
        grid=(M_pad // rt,),
        in_specs=in_specs,
        out_specs=pl.BlockSpec((c_out, rt), lambda i: (0, i)),  # lane-dense
        compiler_params=pltpu.CompilerParams(
            dimension_semantics=("parallel",)),
    )(*inputs)

    return out2t[:, :M].T.reshape(lead_shape + (c_out,))


def init_params(key, num_channels):
    """nn.Linear-layout params: W (out, in), b (out, 1)."""
    params = []
    for i in range(len(num_channels) - 1):
        fan_in, fan_out = num_channels[i], num_channels[i + 1]
        key, kw, kb = jax.random.split(key, 3)
        bound = 1.0 / (fan_in ** 0.5)  # PyTorch nn.Linear default uniform bound
        w = jax.random.uniform(kw, (fan_out, fan_in), jnp.float32, -bound, bound)
        b = jax.random.uniform(kb, (fan_out, 1), jnp.float32, -bound, bound)
        params.append((w, b))
    return params


def reference_forward(x, params, mask=None, *, use_bf16=True):
    """Plain-JAX BasicMLP.forward mirroring the kernel's dtype choices."""
    cd = jnp.bfloat16 if use_bf16 else jnp.float32
    h = x
    for w, b in params:
        h = jnp.dot(h.astype(cd), w.T.astype(cd),
                    preferred_element_type=jnp.float32)
        h = _leaky_relu(h + b[:, 0].astype(jnp.float32))
    if mask is not None:
        h = jnp.where(mask, h, 0.0)
    return h.astype(x.dtype)


if __name__ == "__main__":
    # num_channels = [32, 64, 64, 16] -> Linear(32,64), Linear(64,64), Linear(64,16)
    num_channels = [32, 64, 64, 16]
    B, S = 2, 8

    key = jax.random.PRNGKey(0)
    key, kx, km = jax.random.split(key, 3)
    x = jax.random.normal(kx, (B, S, num_channels[0]), jnp.float32)
    params = init_params(key, num_channels)

    # Unmasked path.
    out = jax.block_until_ready(basic_mlp_forward(x, params))
    ref = reference_forward(x, params)
    assert out.shape == (B, S, num_channels[-1])
    assert jnp.allclose(out, ref, atol=2e-3, rtol=2e-3), \
        float(jnp.max(jnp.abs(out - ref)))

    # Fused-mask path (torch.where(mask, out, 0)), mask broadcast over C_out.
    mask = jax.random.bernoulli(km, 0.7, (B, S, 1))
    out_m = jax.block_until_ready(basic_mlp_forward(x, params, mask=mask))
    ref_m = reference_forward(x, params, mask=mask)
    assert jnp.allclose(out_m, ref_m, atol=2e-3, rtol=2e-3), \
        float(jnp.max(jnp.abs(out_m - ref_m)))

    # f32 path (exact PyTorch math, no bf16 cast).
    out_f32 = jax.block_until_ready(basic_mlp_forward(x, params, use_bf16=False))
    ref_f32 = reference_forward(x, params, use_bf16=False)
    assert jnp.allclose(out_f32, ref_f32, atol=1e-5, rtol=1e-5), \
        float(jnp.max(jnp.abs(out_f32 - ref_f32)))

    # TODO(synk): batchnorm / dropout branches are off by default in BasicMLP
    # and are not implemented in the kernel.

    print("KERNEL_OK")
</pallas_src>

<mosaic_0001>
module attributes {stable_mosaic.version = 11 : i64} {
  func.func @_mlp_kernel(%arg0: i32, %arg1: memref<32x128xbf16, #tpu.memory_space<vmem>>, %arg2: memref<64x32xbf16, #tpu.memory_space<vmem>>, %arg3: memref<64x1xf32, #tpu.memory_space<vmem>>, %arg4: memref<64x64xbf16, #tpu.memory_space<vmem>>, %arg5: memref<64x1xf32, #tpu.memory_space<vmem>>, %arg6: memref<16x64xbf16, #tpu.memory_space<vmem>>, %arg7: memref<16x1xf32, #tpu.memory_space<vmem>>, %arg8: memref<16x128xf32, #tpu.memory_space<vmem>>) attributes {dimension_semantics = [#tpu.dimension_semantics<parallel>], iteration_bounds = array<i64: 1>, scalar_prefetch = 0 : i64, scratch_operands = 0 : i64, tpu.core_type = #tpu.core_type<tc>, window_params = [{transform_indices = @transform_0, window_bounds = array<i64: 32, 128>}, {pipeline_mode = #tpu.pipeline_mode<synchronous>, transform_indices = @transform_1, window_bounds = array<i64: 64, 32>}, {pipeline_mode = #tpu.pipeline_mode<synchronous>, transform_indices = @transform_2, window_bounds = array<i64: 64, 1>}, {pipeline_mode = #tpu.pipeline_mode<synchronous>, transform_indices = @transform_3, window_bounds = array<i64: 64, 64>}, {pipeline_mode = #tpu.pipeline_mode<synchronous>, transform_indices = @transform_4, window_bounds = array<i64: 64, 1>}, {pipeline_mode = #tpu.pipeline_mode<synchronous>, transform_indices = @transform_5, window_bounds = array<i64: 16, 64>}, {pipeline_mode = #tpu.pipeline_mode<synchronous>, transform_indices = @transform_6, window_bounds = array<i64: 16, 1>}, {transform_indices = @transform_7, window_bounds = array<i64: 16, 128>}]} {
    %c0 = arith.constant 0 : index
    %c0_0 = arith.constant 0 : index
    %0 = vector.load %arg1[%c0, %c0_0] : memref<32x128xbf16, #tpu.memory_space<vmem>>, vector<32x128xbf16>
    %c0_1 = arith.constant 0 : index
    %c0_2 = arith.constant 0 : index
    %1 = vector.load %arg2[%c0_1, %c0_2] : memref<64x32xbf16, #tpu.memory_space<vmem>>, vector<64x32xbf16>
    %c0_3 = arith.constant 0 : index
    %c0_4 = arith.constant 0 : index
    %2 = vector.load %arg3[%c0_3, %c0_4] : memref<64x1xf32, #tpu.memory_space<vmem>>, vector<64x1xf32>
    %cst = arith.constant dense<0.000000e+00> : vector<64x128xf32>
    %3 = tpu.matmul %1, %0, %cst {dimension_numbers = #tpu.dot_dimension_numbers<[1], [0], [0], [1], [0, 0, 1, 1], [], []>} : vector<64x32xbf16>, vector<32x128xbf16>, vector<64x128xf32> -> vector<64x128xf32>
    %4 = vector.broadcast %2 : vector<64x1xf32> to vector<64x128xf32>
    %5 = arith.addf %3, %4 : vector<64x128xf32>
    %cst_5 = arith.constant 0.00999999977 : f32
    %6 = vector.broadcast %cst_5 : f32 to vector<64x128xf32>
    %7 = arith.mulf %6, %5 : vector<64x128xf32>
    %8 = arith.maximumf %5, %7 : vector<64x128xf32>
    %c0_6 = arith.constant 0 : index
    %c0_7 = arith.constant 0 : index
    %9 = vector.load %arg4[%c0_6, %c0_7] : memref<64x64xbf16, #tpu.memory_space<vmem>>, vector<64x64xbf16>
    %c0_8 = arith.constant 0 : index
    %c0_9 = arith.constant 0 : index
    %10 = vector.load %arg5[%c0_8, %c0_9] : memref<64x1xf32, #tpu.memory_space<vmem>>, vector<64x1xf32>
    %11 = arith.truncf %8 : vector<64x128xf32> to vector<64x128xbf16>
    %cst_10 = arith.constant dense<0.000000e+00> : vector<64x128xf32>
    %12 = tpu.matmul %9, %11, %cst_10 {dimension_numbers = #tpu.dot_dimension_numbers<[1], [0], [0], [1], [0, 0, 1, 1], [], []>} : vector<64x64xbf16>, vector<64x128xbf16>, vector<64x128xf32> -> vector<64x128xf32>
    %13 = vector.broadcast %10 : vector<64x1xf32> to vector<64x128xf32>
    %14 = arith.addf %12, %13 : vector<64x128xf32>
    %cst_11 = arith.constant 0.00999999977 : f32
    %15 = vector.broadcast %cst_11 : f32 to vector<64x128xf32>
    %16 = arith.mulf %15, %14 : vector<64x128xf32>
    %17 = arith.maximumf %14, %16 : vector<64x128xf32>
    %c0_12 = arith.constant 0 : index
    %c0_13 = arith.constant 0 : index
    %18 = vector.load %arg6[%c0_12, %c0_13] : memref<16x64xbf16, #tpu.memory_space<vmem>>, vector<16x64xbf16>
    %c0_14 = arith.constant 0 : index
    %c0_15 = arith.constant 0 : index
    %19 = vector.load %arg7[%c0_14, %c0_15] : memref<16x1xf32, #tpu.memory_space<vmem>>, vector<16x1xf32>
    %20 = arith.truncf %17 : vector<64x128xf32> to vector<64x128xbf16>
    %cst_16 = arith.constant dense<0.000000e+00> : vector<16x128xf32>
    %21 = tpu.matmul %18, %20, %cst_16 {dimension_numbers = #tpu.dot_dimension_numbers<[1], [0], [0], [1], [0, 0, 1, 1], [], []>} : vector<16x64xbf16>, vector<64x128xbf16>, vector<16x128xf32> -> vector<16x128xf32>
    %22 = vector.broadcast %19 : vector<16x1xf32> to vector<16x128xf32>
    %23 = arith.addf %21, %22 : vector<16x128xf32>
    %cst_17 = arith.constant 0.00999999977 : f32
    %24 = vector.broadcast %cst_17 : f32 to vector<16x128xf32>
    %25 = arith.mulf %24, %23 : vector<16x128xf32>
    %26 = arith.maximumf %23, %25 : vector<16x128xf32>
    %c0_18 = arith.constant 0 : index
    %c0_19 = arith.constant 0 : index
    %27 = vector.load %arg8[%c0_18, %c0_19] : memref<16x128xf32, #tpu.memory_space<vmem>>, vector<16x128xf32>
    tpu.vector_store %arg8[%c0_18, %c0_19], %26 {strides = array<i32>} : memref<16x128xf32, #tpu.memory_space<vmem>>, vector<16x128xf32>,
    return
  }
  func.func @transform_0(%arg0: i32) -> (i32, i32) {
    %c0_i32 = arith.constant 0 : i32
    %c0_i32_0 = arith.constant 0 : i32
    return %c0_i32, %arg0 : i32, i32
  }
  func.func @transform_1(%arg0: i32) -> (i32, i32) {
    %c0_i32 = arith.constant 0 : i32
    %c0_i32_0 = arith.constant 0 : i32
    %c0_i32_1 = arith.constant 0 : i32
    return %c0_i32, %c0_i32_0 : i32, i32
  }
  func.func @transform_2(%arg0: i32) -> (i32, i32) {
    %c0_i32 = arith.constant 0 : i32
    %c0_i32_0 = arith.constant 0 : i32
    %c0_i32_1 = arith.constant 0 : i32
    return %c0_i32, %c0_i32_0 : i32, i32
  }
  func.func @transform_3(%arg0: i32) -> (i32, i32) {
    %c0_i32 = arith.constant 0 : i32
    %c0_i32_0 = arith.constant 0 : i32
    %c0_i32_1 = arith.constant 0 : i32
    return %c0_i32, %c0_i32_0 : i32, i32
  }
  func.func @transform_4(%arg0: i32) -> (i32, i32) {
    %c0_i32 = arith.constant 0 : i32
    %c0_i32_0 = arith.constant 0 : i32
    %c0_i32_1 = arith.constant 0 : i32
    return %c0_i32, %c0_i32_0 : i32, i32
  }
  func.func @transform_5(%arg0: i32) -> (i32, i32) {
    %c0_i32 = arith.constant 0 : i32
    %c0_i32_0 = arith.constant 0 : i32
    %c0_i32_1 = arith.constant 0 : i32
    return %c0_i32, %c0_i32_0 : i32, i32
  }
  func.func @transform_6(%arg0: i32) -> (i32, i32) {
    %c0_i32 = arith.constant 0 : i32
    %c0_i32_0 = arith.constant 0 : i32
    %c0_i32_1 = arith.constant 0 : i32
    return %c0_i32, %c0_i32_0 : i32, i32
  }
  func.func @transform_7(%arg0: i32) -> (i32, i32) {
    %c0_i32 = arith.constant 0 : i32
    %c0_i32_0 = arith.constant 0 : i32
    return %c0_i32, %arg0 : i32, i32
  }
}

</mosaic_0001>

<llo_original>
// kernel: tpu_custom_call.1
$region0: #{tpu_custom_call.1}
  #allocation0 [shape = 'u32[]', space=smem, size = 0x4, offset = 0x4, fixed_abs, tag = 'smem constant byte address 0x4 - core index']
  #allocation1 [shape = 'u32[144,128]{1,0:T(1,128)}', space=vmem, size = 0x12000, scoped, tag = 'internal scratch']
  %s0 = inlined_call_operand.vmem [shape: bf16[32,128], index: 0, kind: input, shape index: {}]
  %s1 = inlined_call_operand.vmem [shape: bf16[64,32], index: 1, kind: input, shape index: {}]
  %s2 = inlined_call_operand.vmem [shape: f32[64,1], index: 2, kind: input, shape index: {}]
  %s3 = inlined_call_operand.vmem [shape: bf16[64,64], index: 3, kind: input, shape index: {}]
  %s4 = inlined_call_operand.vmem [shape: f32[64,1], index: 4, kind: input, shape index: {}]
  %s5 = inlined_call_operand.vmem [shape: bf16[16,64], index: 5, kind: input, shape index: {}]
  %s6 = inlined_call_operand.vmem [shape: f32[16,1], index: 6, kind: input, shape index: {}]
  %s7 = inlined_call_operand.hbm [shape: f32[16,128], index: 7, kind: output, shape index: {}]
  %s8 = sld [smem:[#allocation0]]
  $region38: #{tpu_custom_call.1} parent=0
    _
  %s10 = ssub.s32 1, %s8
  %s11 = scalar_select 0, %s10, %s8
  $region1: #{tpu_custom_call.1} parent=0
    #allocation2 [shape = 'u8[8192]{0}', space=vmem, size = 0x2000, scoped, tag = 'output window, operand 0, single buffered']
    #allocation3 [shape = 's32[1]{0}', space=sflag, size = 0x4, scoped, tag = 'scoped memory for tpu_custom_call.1']
    %12 = vsyncpa [#allocation3], 0
    // Predicated region
    $region2: #{tpu_custom_call.1} parent=1 // pred_check
      _
    $region3: #{tpu_custom_call.1} parent=1 // pred_check_branch
      %14 = sbr.rel (0) target = $region5
    $region4: #{tpu_custom_call.1} parent=1 // pred_region
      _
    $region5: #{tpu_custom_call.1} parent=1 // pred_fallthru
      _
    // Predicated region
    $region6: #{tpu_custom_call.1} parent=1 // pred_check
      _
    $region7: #{tpu_custom_call.1} parent=1 // pred_check_branch
      %16 = sbr.rel (0) target = $region9
    $region8: #{tpu_custom_call.1} parent=1 // pred_region
      _
    $region9: #{tpu_custom_call.1} parent=1 // pred_fallthru
      _
    // Predicated region
    $region10: #{tpu_custom_call.1} parent=1 // pred_check
      _
    $region11: #{tpu_custom_call.1} parent=1 // pred_check_branch
      %18 = sbr.rel (0) target = $region13
    $region12: #{tpu_custom_call.1} parent=1 // pred_region
      _
    $region13: #{tpu_custom_call.1} parent=1 // pred_fallthru
      _
    // Predicated region
    $region14: #{tpu_custom_call.1} parent=1 // pred_check
      _
    $region15: #{tpu_custom_call.1} parent=1 // pred_check_branch
      %20 = sbr.rel (0) target = $region17
    $region16: #{tpu_custom_call.1} parent=1 // pred_region
      _
    $region17: #{tpu_custom_call.1} parent=1 // pred_fallthru
      _
    // Predicated region
    $region18: #{tpu_custom_call.1} parent=1 // pred_check
      _
    $region19: #{tpu_custom_call.1} parent=1 // pred_check_branch
      %22 = sbr.rel (0) target = $region21
    $region20: #{tpu_custom_call.1} parent=1 // pred_region
      _
    $region21: #{tpu_custom_call.1} parent=1 // pred_fallthru
      _
    // Predicated region
    $region22: #{tpu_custom_call.1} parent=1 // pred_check
      _
    $region23: #{tpu_custom_call.1} parent=1 // pred_check_branch
      %24 = sbr.rel (0) target = $region25
    $region24: #{tpu_custom_call.1} parent=1 // pred_region
      _
    $region25: #{tpu_custom_call.1} parent=1 // pred_fallthru
      _
    // Predicated region
    $region26: #{tpu_custom_call.1} parent=1 // pred_check
      _
    $region27: #{tpu_custom_call.1} parent=1 // pred_check_branch
      %26 = sbr.rel (0) target = $region29
    $region28: #{tpu_custom_call.1} parent=1 // pred_region
      _
    $region29: #{tpu_custom_call.1} parent=1 // pred_fallthru
      _
    %v28 = vld [vmem:[%s0] sm:$0xf]
    %v29 = vld [vmem:[%s0 + $0x4] sm:$0xf]
    %v30 = vld [vmem:[%s0 + $0x8] sm:$0xf]
    %v31 = vld [vmem:[%s0 + $0xc] sm:$0xf]
    %v32 = vld [vmem:[%s1] sm:$0xf]
    %v33 = vld [vmem:[%s1 + $0x4] sm:$0xf]
    %v34 = vld [vmem:[%s1 + $0x8] sm:$0xf]
    %v35 = vld [vmem:[%s1 + $0xc] sm:$0xf]
    %v36 = vld [vmem:[%s1 + $0x10] sm:$0xf]
    %v37 = vld [vmem:[%s1 + $0x14] sm:$0xf]
    %v38 = vld [vmem:[%s1 + $0x18] sm:$0xf]
    %v39 = vld [vmem:[%s1 + $0x1c] sm:$0xf]
    %v40 = vld [vmem:[%s2] sm:$0xff]
    %v41 = vld [vmem:[%s2 + $0x8] sm:$0xff]
    %v42 = vld [vmem:[%s2 + $0x10] sm:$0xff]
    %v43 = vld [vmem:[%s2 + $0x18] sm:$0xff]
    %v44 = vld [vmem:[%s2 + $0x20] sm:$0xff]
    %v45 = vld [vmem:[%s2 + $0x28] sm:$0xff]
    %v46 = vld [vmem:[%s2 + $0x30] sm:$0xff]
    %v47 = vld [vmem:[%s2 + $0x38] sm:$0xff]
    %49 = vset.pattern.permute.xlu0 0
    %50 = vperm.xlu0 %49, %v40
    %v51 = vpop.permute.xlu0 %50
    %54 = vset.pattern.permute.xlu0 0
    %55 = vperm.xlu0 %54, %v41
    %v56 = vpop.permute.xlu0 %55
    %59 = vset.pattern.permute.xlu0 0
    %60 = vperm.xlu0 %59, %v42
    %v61 = vpop.permute.xlu0 %60
    %64 = vset.pattern.permute.xlu0 0
    %65 = vperm.xlu0 %64, %v43
    %v66 = vpop.permute.xlu0 %65
    %69 = vset.pattern.permute.xlu0 0
    %70 = vperm.xlu0 %69, %v44
    %v71 = vpop.permute.xlu0 %70
    %74 = vset.pattern.permute.xlu0 0
    %75 = vperm.xlu0 %74, %v45
    %v76 = vpop.permute.xlu0 %75
    %79 = vset.pattern.permute.xlu0 0
    %80 = vperm.xlu0 %79, %v46
    %v81 = vpop.permute.xlu0 %80
    %84 = vset.pattern.permute.xlu0 0
    %85 = vperm.xlu0 %84, %v47
    %v86 = vpop.permute.xlu0 %85
    %v96 = vunpack.c.l.b16 %v32
    %v97 = vunpack.c.l.b16 %v33
    %v98 = vunpack.c.l.b16 %v34
    %v99 = vunpack.c.l.b16 %v35
    %v100 = vunpack.c.l.b16 %v36
    %v101 = vunpack.c.l.b16 %v37
    %v102 = vunpack.c.l.b16 %v38
    %v103 = vunpack.c.l.b16 %v39
    %v104 = vpack.c.b16 %v97, %v96
    %v105 = vpack.c.b16 %v99, %v98
    %v106 = vpack.c.b16 %v101, %v100
    %v107 = vpack.c.b16 %v103, %v102
    %v112 = vunpack.c.l.b16 %v28
    %v113 = vunpack.c.l.b16 %v29
    %v114 = vunpack.c.l.b16 %v30
    %v115 = vunpack.c.l.b16 %v31
    %v116 = vpack.c.b16 %v113, %v112
    %v117 = vpack.c.b16 %v115, %v114
    %vm120 = vcmask 261120
    %v122 = vsel %vm120, %v104, 0
    %v125 = vsel %vm120, %v105, 0
    %v128 = vsel %vm120, %v106, 0
    %v131 = vsel %vm120, %v107, 0
    %133 = vmatprep.subr.bf16.mxu0 0
    %134 = vmatpush1.bf16.msra.mxu0 %v116
    %135 = vmatprep.subr.bf16.mxu0 0
    %136 = vmatpush1.bf16.msra.mxu0 %v117
    %137 = vmatprep.subr.bf16.mxu0 0
    %138 = vmatpush1.bf16.msra.mxu0 0
    %139 = vmatprep.subr.bf16.mxu0 0
    %140 = vmatpush1.bf16.msra.mxu0 0
    %141 = vmatprep.subr.bf16.mxu0 0
    %142 = vmatpush1.bf16.msra.mxu0 0
    %143 = vmatprep.subr.bf16.mxu0 0
    %144 = vmatpush1.bf16.msra.mxu0 0
    %145 = vmatprep.subr.bf16.mxu0 0
    %146 = vmatpush1.bf16.msra.mxu0 0
    %147 = vmatprep.subr.bf16.mxu0 0
    %148 = vmatpush1.bf16.msra.mxu0 0
    %149 = vmatprep.subr.bf16.mxu0 0
    %150 = vmatpush1.bf16.msra.mxu0 0
    %151 = vmatprep.subr.bf16.mxu0 0
    %152 = vmatpush1.bf16.msra.mxu0 0
    %153 = vmatprep.subr.bf16.mxu0 0
    %154 = vmatpush1.bf16.msra.mxu0 0
    %155 = vmatprep.subr.bf16.mxu0 0
    %156 = vmatpush1.bf16.msra.mxu0 0
    %157 = vmatprep.subr.bf16.mxu0 0
    %158 = vmatpush1.bf16.msra.mxu0 0
    %159 = vmatprep.subr.bf16.mxu0 0
    %160 = vmatpush1.bf16.msra.mxu0 0
    %161 = vmatprep.subr.bf16.mxu0 0
    %162 = vmatpush1.bf16.msra.mxu0 0
    %163 = vmatprep.subr.bf16.mxu0 0
    %164 = vmatpush1.bf16.msra.mxu0 0
    %165 = vmatprep.mubr.bf16.mxu0 0
    %166 = vmatmul.mubr.bf16.gmra.mrb[0].mxu0 %v122
    %v167 = vpop.f32.mrb[0].mxu0
    %v168 = vadd.f32 %v51, %v167
    %v169 = vpop.f32.mrb[0].mxu0
    %v170 = vpop.f32.mrb[0].mxu0
    %v171 = vadd.f32 %v56, %v170
    %v172 = vpop.f32.mrb[0].mxu0
    %173 = vmatprep.mubr.bf16.mxu0 0
    %174 = vmatmul.mubr.bf16.gmra.mrb[0].mxu0 %v125
    %v175 = vpop.f32.mrb[0].mxu0
    %v176 = vadd.f32 %v61, %v175
    %v177 = vpop.f32.mrb[0].mxu0
    %v178 = vpop.f32.mrb[0].mxu0
    %v179 = vadd.f32 %v66, %v178
    %v180 = vpop.f32.mrb[0].mxu0
    %181 = vmatprep.mubr.bf16.mxu0 0
    %182 = vmatmul.mubr.bf16.gmra.mrb[0].mxu0 %v128
    %v183 = vpop.f32.mrb[0].mxu0
    %v184 = vadd.f32 %v71, %v183
    %v185 = vpop.f32.mrb[0].mxu0
    %v186 = vpop.f32.mrb[0].mxu0
    %v187 = vadd.f32 %v76, %v186
    %v188 = vpop.f32.mrb[0].mxu0
    %189 = vmatprep.mubr.bf16.mxu0 0
    %190 = vmatmul.mubr.bf16.gmra.mrb[0].mxu0 %v131
    %v191 = vpop.f32.mrb[0].mxu0
    %v192 = vadd.f32 %v81, %v191
    %v193 = vpop.f32.mrb[0].mxu0
    %v194 = vpop.f32.mrb[0].mxu0
    %v195 = vadd.f32 %v86, %v194
    %v196 = vpop.f32.mrb[0].mxu0
    %197 = vdwg.mxu0
    %v198 = vmul.f32 %v168, 0.01
    %v199 = vmul.f32 %v171, 0.01
    %v200 = vmul.f32 %v176, 0.01
    %v201 = vmul.f32 %v179, 0.01
    %v202 = vmul.f32 %v184, 0.01
    %v203 = vmul.f32 %v187, 0.01
    %v204 = vmul.f32 %v192, 0.01
    %v205 = vmul.f32 %v195, 0.01
    %v206 = vmax.f32 %v168, %v198
    %v207 = vmax.f32 %v171, %v199
    %v208 = vmax.f32 %v176, %v200
    %v209 = vmax.f32 %v179, %v201
    %v210 = vmax.f32 %v184, %v202
    %v211 = vmax.f32 %v187, %v203
    %v212 = vmax.f32 %v192, %v204
    %v213 = vmax.f32 %v195, %v205
    %v214 = vld [vmem:[%s3] sm:$0xf]
    %v215 = vld [vmem:[%s3 + $0x4] sm:$0xf]
    %v216 = vld [vmem:[%s3 + $0x8] sm:$0xf]
    %v217 = vld [vmem:[%s3 + $0xc] sm:$0xf]
    %v218 = vld [vmem:[%s3 + $0x10] sm:$0xf]
    %v219 = vld [vmem:[%s3 + $0x14] sm:$0xf]
    %v220 = vld [vmem:[%s3 + $0x18] sm:$0xf]
    %v221 = vld [vmem:[%s3 + $0x1c] sm:$0xf]
    %v222 = vld [vmem:[%s4] sm:$0xff]
    %v223 = vld [vmem:[%s4 + $0x8] sm:$0xff]
    %v224 = vld [vmem:[%s4 + $0x10] sm:$0xff]
    %v225 = vld [vmem:[%s4 + $0x18] sm:$0xff]
    %v226 = vld [vmem:[%s4 + $0x20] sm:$0xff]
    %v227 = vld [vmem:[%s4 + $0x28] sm:$0xff]
    %v228 = vld [vmem:[%s4 + $0x30] sm:$0xff]
    %v229 = vld [vmem:[%s4 + $0x38] sm:$0xff]
    %v230 = vpack.c.bf16 %v207, %v206
    %v231 = vpack.c.bf16 %v209, %v208
    %v232 = vpack.c.bf16 %v211, %v210
    %v233 = vpack.c.bf16 %v213, %v212
    %235 = vset.pattern.permute.xlu0 0
    %236 = vperm.xlu0 %235, %v222
    %v237 = vpop.permute.xlu0 %236
    %240 = vset.pattern.permute.xlu0 0
    %241 = vperm.xlu0 %240, %v223
    %v242 = vpop.permute.xlu0 %241
    %245 = vset.pattern.permute.xlu0 0
    %246 = vperm.xlu0 %245, %v224
    %v247 = vpop.permute.xlu0 %246
    %250 = vset.pattern.permute.xlu0 0
    %251 = vperm.xlu0 %250, %v225
    %v252 = vpop.permute.xlu0 %251
    %255 = vset.pattern.permute.xlu0 0
    %256 = vperm.xlu0 %255, %v226
    %v257 = vpop.permute.xlu0 %256
    %260 = vset.pattern.permute.xlu0 0
    %261 = vperm.xlu0 %260, %v227
    %v262 = vpop.permute.xlu0 %261
    %265 = vset.pattern.permute.xlu0 0
    %266 = vperm.xlu0 %265, %v228
    %v267 = vpop.permute.xlu0 %266
    %270 = vset.pattern.permute.xlu0 0
    %271 = vperm.xlu0 %270, %v229
    %v272 = vpop.permute.xlu0 %271
    %v282 = vunpack.c.l.b16 %v214
    %v283 = vunpack.c.l.b16 %v215
    %v284 = vunpack.c.l.b16 %v216
    %v285 = vunpack.c.l.b16 %v217
    %v286 = vunpack.c.l.b16 %v218
    %v287 = vunpack.c.l.b16 %v219
    %v288 = vunpack.c.l.b16 %v220
    %v289 = vunpack.c.l.b16 %v221
    %v290 = vpack.c.b16 %v283, %v282
    %v291 = vpack.c.b16 %v285, %v284
    %v292 = vpack.c.b16 %v287, %v286
    %v293 = vpack.c.b16 %v289, %v288
    %vm294 = vcmask 523264
    %v296 = vsel %vm294, %v290, 0
    %v299 = vsel %vm294, %v291, 0
    %v302 = vsel %vm294, %v292, 0
    %v305 = vsel %vm294, %v293, 0
    %307 = vmatprep.subr.bf16.mxu0 0
    %308 = vmatpush1.bf16.msra.mxu0 %v230
    %309 = vmatprep.subr.bf16.mxu0 0
    %310 = vmatpush1.bf16.msra.mxu0 %v231
    %311 = vmatprep.subr.bf16.mxu0 0
    %312 = vmatpush1.bf16.msra.mxu0 %v232
    %313 = vmatprep.subr.bf16.mxu0 0
    %314 = vmatpush1.bf16.msra.mxu0 %v233
    %315 = vmatprep.subr.bf16.mxu0 0
    %316 = vmatpush1.bf16.msra.mxu0 0
    %317 = vmatprep.subr.bf16.mxu0 0
    %318 = vmatpush1.bf16.msra.mxu0 0
    %319 = vmatprep.subr.bf16.mxu0 0
    %320 = vmatpush1.bf16.msra.mxu0 0
    %321 = vmatprep.subr.bf16.mxu0 0
    %322 = vmatpush1.bf16.msra.mxu0 0
    %323 = vmatprep.subr.bf16.mxu0 0
    %324 = vmatpush1.bf16.msra.mxu0 0
    %325 = vmatprep.subr.bf16.mxu0 0
    %326 = vmatpush1.bf16.msra.mxu0 0
    %327 = vmatprep.subr.bf16.mxu0 0
    %328 = vmatpush1.bf16.msra.mxu0 0
    %329 = vmatprep.subr.bf16.mxu0 0
    %330 = vmatpush1.bf16.msra.mxu0 0
    %331 = vmatprep.subr.bf16.mxu0 0
    %332 = vmatpush1.bf16.msra.mxu0 0
    %333 = vmatprep.subr.bf16.mxu0 0
    %334 = vmatpush1.bf16.msra.mxu0 0
    %335 = vmatprep.subr.bf16.mxu0 0
    %336 = vmatpush1.bf16.msra.mxu0 0
    %337 = vmatprep.subr.bf16.mxu0 0
    %338 = vmatpush1.bf16.msra.mxu0 0
    %339 = vmatprep.mubr.bf16.mxu0 0
    %340 = vmatmul.mubr.bf16.gmra.mrb[0].mxu0 %v296
    %v341 = vpop.f32.mrb[0].mxu0
    %v342 = vadd.f32 %v237, %v341
    %v343 = vpop.f32.mrb[0].mxu0
    %v344 = vpop.f32.mrb[0].mxu0
    %v345 = vadd.f32 %v242, %v344
    %v346 = vpop.f32.mrb[0].mxu0
    %347 = vmatprep.mubr.bf16.mxu0 0
    %348 = vmatmul.mubr.bf16.gmra.mrb[0].mxu0 %v299
    %v349 = vpop.f32.mrb[0].mxu0
    %v350 = vadd.f32 %v247, %v349
    %v351 = vpop.f32.mrb[0].mxu0
    %v352 = vpop.f32.mrb[0].mxu0
    %v353 = vadd.f32 %v252, %v352
    %v354 = vpop.f32.mrb[0].mxu0
    %355 = vmatprep.mubr.bf16.mxu0 0
    %356 = vmatmul.mubr.bf16.gmra.mrb[0].mxu0 %v302
    %v357 = vpop.f32.mrb[0].mxu0
    %v358 = vadd.f32 %v257, %v357
    %v359 = vpop.f32.mrb[0].mxu0
    %v360 = vpop.f32.mrb[0].mxu0
    %v361 = vadd.f32 %v262, %v360
    %v362 = vpop.f32.mrb[0].mxu0
    %363 = vmatprep.mubr.bf16.mxu0 0
    %364 = vmatmul.mubr.bf16.gmra.mrb[0].mxu0 %v305
    %v365 = vpop.f32.mrb[0].mxu0
    %v366 = vadd.f32 %v267, %v365
    %v367 = vpop.f32.mrb[0].mxu0
    %v368 = vpop.f32.mrb[0].mxu0
    %v369 = vadd.f32 %v272, %v368
    %v370 = vpop.f32.mrb[0].mxu0
    %371 = vdwg.mxu0
    %v372 = vmul.f32 %v342, 0.01
    %v373 = vmul.f32 %v345, 0.01
    %v374 = vmul.f32 %v350, 0.01
    %v375 = vmul.f32 %v353, 0.01
    %v376 = vmul.f32 %v358, 0.01
    %v377 = vmul.f32 %v361, 0.01
    %v378 = vmul.f32 %v366, 0.01
    %v379 = vmul.f32 %v369, 0.01
    %v380 = vmax.f32 %v342, %v372
    %v381 = vmax.f32 %v345, %v373
    %v382 = vmax.f32 %v350, %v374
    %v383 = vmax.f32 %v353, %v375
    %v384 = vmax.f32 %v358, %v376
    %v385 = vmax.f32 %v361, %v377
    %v386 = vmax.f32 %v366, %v378
    %v387 = vmax.f32 %v369, %v379
    %v388 = vld [vmem:[%s5] sm:$0xf]
    %v389 = vld [vmem:[%s5 + $0x4] sm:$0xf]
    %v390 = vld [vmem:[%s6] sm:$0xff]
    %v391 = vld [vmem:[%s6 + $0x8] sm:$0xff]
    %v392 = vpack.c.bf16 %v381, %v380
    %v393 = vpack.c.bf16 %v383, %v382
    %v394 = vpack.c.bf16 %v385, %v384
    %v395 = vpack.c.bf16 %v387, %v386
    %397 = vset.pattern.permute.xlu0 0
    %398 = vperm.xlu0 %397, %v390
    %v399 = vpop.permute.xlu0 %398
    %402 = vset.pattern.permute.xlu0 0
    %403 = vperm.xlu0 %402, %v391
    %v404 = vpop.permute.xlu0 %403
    %v408 = vunpack.c.l.b16 %v388
    %v409 = vunpack.c.l.b16 %v389
    %v410 = vpack.c.b16 %v409, %v408
    %v412 = vsel %vm294, %v410, 0
    %414 = vmatprep.subr.bf16.mxu0 0
    %415 = vmatpush1.bf16.msra.mxu0 %v392
    %416 = vmatprep.subr.bf16.mxu0 0
    %417 = vmatpush1.bf16.msra.mxu0 %v393
    %418 = vmatprep.subr.bf16.mxu0 0
    %419 = vmatpush1.bf16.msra.mxu0 %v394
    %420 = vmatprep.subr.bf16.mxu0 0
    %421 = vmatpush1.bf16.msra.mxu0 %v395
    %422 = vmatprep.subr.bf16.mxu0 0
    %423 = vmatpush1.bf16.msra.mxu0 0
    %424 = vmatprep.subr.bf16.mxu0 0
    %425 = vmatpush1.bf16.msra.mxu0 0
    %426 = vmatprep.subr.bf16.mxu0 0
    %427 = vmatpush1.bf16.msra.mxu0 0
    %428 = vmatprep.subr.bf16.mxu0 0
    %429 = vmatpush1.bf16.msra.mxu0 0
    %430 = vmatprep.subr.bf16.mxu0 0
    %431 = vmatpush1.bf16.msra.mxu0 0
    %432 = vmatprep.subr.bf16.mxu0 0
    %433 = vmatpush1.bf16.msra.mxu0 0
    %434 = vmatprep.subr.bf16.mxu0 0
    %435 = vmatpush1.bf16.msra.mxu0 0
    %436 = vmatprep.subr.bf16.mxu0 0
    %437 = vmatpush1.bf16.msra.mxu0 0
    %438 = vmatprep.subr.bf16.mxu0 0
    %439 = vmatpush1.bf16.msra.mxu0 0
    %440 = vmatprep.subr.bf16.mxu0 0
    %441 = vmatpush1.bf16.msra.mxu0 0
    %442 = vmatprep.subr.bf16.mxu0 0
    %443 = vmatpush1.bf16.msra.mxu0 0
    %444 = vmatprep.subr.bf16.mxu0 0
    %445 = vmatpush1.bf16.msra.mxu0 0
    %446 = vmatprep.mubr.bf16.mxu0 0
    %447 = vmatmul.mubr.bf16.gmra.mrb[0].mxu0 %v412
    %v448 = vpop.f32.mrb[0].mxu0
    %v449 = vadd.f32 %v399, %v448
    %v450 = vpop.f32.mrb[0].mxu0
    %v451 = vpop.f32.mrb[0].mxu0
    %v452 = vadd.f32 %v404, %v451
    %v453 = vpop.f32.mrb[0].mxu0
    %454 = vdwg.mxu0
    %v455 = vmul.f32 %v449, 0.01
    %v456 = vmul.f32 %v452, 0.01
    %v457 = vmax.f32 %v449, %v455
    %v458 = vmax.f32 %v452, %v456
    %459 = vst [vmem:[#allocation2] sm:$0xff] %v457
    %460 = vst [vmem:[#allocation2 + $0x8] sm:$0xff] %v458
    // Predicated region
    $region30: #{tpu_custom_call.1} parent=1 // pred_check
      _
    $region31: #{tpu_custom_call.1} parent=1 // pred_check_branch
      %462 = sbr.rel (0) target = $region33
    $region32: #{tpu_custom_call.1} parent=1 // pred_region
      %s464 = ssub.s32 256, 256
      %465 = vsyncadd [#allocation3], %s464
      %s466 = sshll.u32 [#allocation2], 4
      %s467 = int_to_ptr.vmem [resolvable:$true] %s466
      %472 = dma.vmem_to_hbm [thread:$0]  %s467, 256, %s7, [#allocation3], 128, 128, 8
    $region33: #{tpu_custom_call.1} parent=1 // pred_fallthru
      _
    // Predicated region
    $region34: #{tpu_custom_call.1} parent=1 // pred_check
      _
    $region35: #{tpu_custom_call.1} parent=1 // pred_check_branch
      %474 = sbr.rel (0) target = $region37
    $region36: #{tpu_custom_call.1} parent=1 // pred_region
      %475 = dma.done [#allocation3], 256
    $region37: #{tpu_custom_call.1} parent=1 // pred_fallthru
      _
    %476 = vsyncpa [#allocation3], 1

</llo_original>
